<compile_context>
chip_gen: v7x
topology: tpu7x:2x2x1
jax: 0.10.0
libtpu: 0.0.40
codegen_flags: <defaults>
</compile_context>

<pallas_src>
import jax
import jax.numpy as jnp
from jax import lax
from jax.experimental import pallas as pl
from jax.experimental.pallas import tpu as pltpu

_MIB = 1024 * 1024


def _round_up(v, m):
    return (v + m - 1) // m * m


def _cdiv(a, b):
    return (a + b - 1) // b


def _vmem_limit_bytes():
    """Generation-aware scoped-VMEM ceiling (~48 MiB on v7x, ~96 MiB on v5e/v6e)."""
    try:
        cap = int(pltpu.get_tpu_info().vmem_capacity_bytes)
    except Exception:
        cap = 64 * _MIB  # conservative fallback (v7x physical VMEM per TC)
    return int(min(max(cap * 3 // 4, 32 * _MIB), 96 * _MIB))


def _make_kernel(k_rem):
    """k_rem > 0 <=> the genome dim is K-tiled with a ragged last block."""

    def kernel(x_ref, w_ref, b_ref, o_ref):
        # x_ref: (TB, TK) batch x genome tile (pipelined over the grid)
        # w_ref: (2, TK)  gamma-folded weight tile
        # b_ref: (2, 1)   gamma-folded bias
        # o_ref: (2, TB)  lane-dense output tile, resident across the K axis
        k = pl.program_id(1)

        @pl.when(k == 0)
        def _init():
            # Initialize the accumulator with the (lane-broadcast) bias.
            o_ref[...] = jnp.broadcast_to(b_ref[...], o_ref.shape)

        x = x_ref[...]
        if k_rem:
            # Ragged last K block: zero the garbage lanes so they contribute 0.
            lane = lax.broadcasted_iota(jnp.int32, x.shape, 1)
            is_last = k == pl.num_programs(1) - 1
            x = jnp.where(jnp.logical_and(is_last, lane >= k_rem),
                          jnp.zeros_like(x), x)

        # w @ x^T (MXU trans_b form): contraction over the genome dim; the
        # (2, TB) result keeps the batch tile on the lane axis -> unmasked vst.
        o_ref[...] += lax.dot_general(
            w_ref[...], x,
            dimension_numbers=(((1,), (1,)), ((), ())),
            preferred_element_type=jnp.float32,
        )

    return kernel


def simple_graphing_forward(x, weight, bias, gamma, *,
                            force_pallas=False, max_tb=None):
    """SimpleGraphingModel.forward: (x @ weight.T + bias) * gamma.

    x: (B, N); weight: (2, N); bias: (2,); gamma: scalar. Returns (B, 2) f32.
    `max_tb` caps the batch tile (mainly to exercise the multi-tile path in tests).
    """
    B, N = x.shape
    gamma = jnp.asarray(gamma, jnp.float32)
    itemsize = jnp.dtype(x.dtype).itemsize

    # Small-problem fast path: for a few hundred KiB of data the fixed
    # pallas_call overhead dwarfs the work; plain XLA fusion is strictly faster.
    if not force_pallas and B * N * itemsize < (256 << 10):
        y = jnp.dot(x.astype(jnp.float32), weight.astype(jnp.float32).T)
        return (y + bias.astype(jnp.float32)) * gamma

    # Fold gamma into the parameters (O(N) wrapper work; removes a VPU
    # broadcast-multiply and one operand stream from the kernel).
    w = (weight.astype(jnp.float32) * gamma).astype(x.dtype)      # (2, N)
    b = (bias.astype(jnp.float32) * gamma).reshape(2, 1)          # (2, 1)

    vmem_limit = _vmem_limit_bytes()
    x_budget = vmem_limit // 2           # budget for the double-buffered x tiles

    # --- contraction (genome) tiling: only needed for very large N ----------
    row_bytes_full = _round_up(N, 128) * itemsize
    if 2 * 128 * row_bytes_full <= x_budget:
        TK, grid_k = N, 1                # contract the whole genome per step
    else:
        TK = max(128, (x_budget // (8 * 128 * itemsize)) // 128 * 128)
        grid_k = _cdiv(N, TK)
    k_rem = (N % TK) if grid_k > 1 else 0

    if grid_k * TK != N:                 # zero-pad only the tiny weight, never x
        w = jnp.pad(w, ((0, 0), (0, grid_k * TK - N)))

    # --- batch tiling: size by bytes-per-step under the VMEM budget ---------
    tile_row_bytes = _round_up(TK, 128) * itemsize
    target_bytes = 4 * _MIB              # >= ~1-2 MiB/step amortizes ~0.35us/step
    tb_target = max(128, target_bytes // tile_row_bytes // 128 * 128)
    tb_budget = max(128, x_budget // (2 * tile_row_bytes) // 128 * 128)
    tb_cap = min(tb_target, tb_budget)
    if max_tb is not None:
        tb_cap = max(128, (min(tb_cap, max_tb) // 128) * 128)

    if B <= tb_cap:
        TB, grid_b, Bp = B, 1, B         # single batch block == full array dims
    else:
        TB = tb_cap                      # multiple of 128 -> lane-dense output
        grid_b = _cdiv(B, TB)            # Pallas clips the ragged boundary block
        Bp = grid_b * TB                 # only the tiny (2, Bp) output is padded

    kernel = _make_kernel(k_rem)
    cost = pl.CostEstimate(
        flops=2 * B * N * 2,
        transcendentals=0,
        bytes_accessed=(B * N + 2 * N) * itemsize + (2 + 2 * Bp) * 4,
    )

    def run(single_buffer_consts):
        # Grid-invariant operands don't need double buffering; freeing their
        # second buffer leaves more VMEM for bigger x tiles.
        cpm = {"pipeline_mode": pl.Buffered(1)} if single_buffer_consts else {}
        wpm = cpm if grid_k == 1 else {}   # weight is grid-invariant only w/o K tiling
        return pl.pallas_call(
            kernel,
            out_shape=jax.ShapeDtypeStruct((2, Bp), jnp.float32),
            grid=(grid_b, grid_k),
            in_specs=[
                pl.BlockSpec((TB, TK), lambda i, k: (i, k)),       # x: batch/K tiled
                pl.BlockSpec((2, TK), lambda i, k: (0, k), **wpm),  # weight
                pl.BlockSpec((2, 1), lambda i, k: (0, 0), **cpm),   # bias
            ],
            out_specs=pl.BlockSpec((2, TB), lambda i, k: (0, i)),
            compiler_params=pltpu.CompilerParams(
                dimension_semantics=("parallel", "arbitrary"),
                vmem_limit_bytes=vmem_limit,
            ),
            cost_estimate=cost,
        )(x, w, b)

    try:
        out_padded = run(True)
    except Exception:
        # Fallback if single-buffering constants isn't supported by this version.
        out_padded = run(False)

    # (2, Bp) -> (B, 2); slicing/transposing the tiny result is wrapper glue.
    return out_padded[:, :B].T


if __name__ == "__main__":
    key = jax.random.PRNGKey(0)
    k_x, k_w, k_b, k_x2, k_w2, k_b2 = jax.random.split(key, 6)

    gamma = jnp.float32(1.25)

    # Case 1: the module's nominal small shapes (nn.Linear(genome_size, 2)),
    # forced through the Pallas path so the kernel itself is exercised.
    batch, genome_size = 8, 32
    x = jax.random.normal(k_x, (batch, genome_size), dtype=jnp.float32)
    bound = 1.0 / (genome_size ** 0.5)
    weight = jax.random.uniform(k_w, (2, genome_size), jnp.float32, -bound, bound)
    bias = jax.random.uniform(k_b, (2,), jnp.float32, -bound, bound)

    out = simple_graphing_forward(x, weight, bias, gamma, force_pallas=True)
    out = jax.block_until_ready(out)
    ref = (x @ weight.T + bias) * gamma
    assert out.shape == (batch, 2)
    assert jnp.allclose(out, ref, atol=1e-5, rtol=1e-5)

    # Case 2: ragged multi-tile batch (B % TB != 0) exercising the no-pad cdiv
    # grid + boundary-block clipping + lane-dense (2, TB) output path.
    batch2, genome2 = 300, 256
    x2 = jax.random.normal(k_x2, (batch2, genome2), dtype=jnp.float32)
    bound2 = 1.0 / (genome2 ** 0.5)
    weight2 = jax.random.uniform(k_w2, (2, genome2), jnp.float32, -bound2, bound2)
    bias2 = jax.random.uniform(k_b2, (2,), jnp.float32, -bound2, bound2)

    out2 = simple_graphing_forward(x2, weight2, bias2, gamma,
                                   force_pallas=True, max_tb=128)
    out2 = jax.block_until_ready(out2)
    ref2 = (x2 @ weight2.T + bias2) * gamma
    assert out2.shape == (batch2, 2)
    assert jnp.allclose(out2, ref2, atol=1e-4, rtol=1e-4)

    # Case 3: default entry point — small problems take the XLA fast path.
    out3 = simple_graphing_forward(x, weight, bias, gamma)
    out3 = jax.block_until_ready(out3)
    assert jnp.allclose(out3, ref, atol=1e-5, rtol=1e-5)

    print("KERNEL_OK")
</pallas_src>

<mosaic_0001>
module attributes {stable_mosaic.version = 11 : i64} {
  func.func @kernel(%arg0: i32, %arg1: i32, %arg2: memref<8x32xf32, #tpu.memory_space<vmem>>, %arg3: memref<2x32xf32, #tpu.memory_space<vmem>>, %arg4: memref<2x1xf32, #tpu.memory_space<vmem>>, %arg5: memref<2x8xf32, #tpu.memory_space<vmem>>) attributes {dimension_semantics = [#tpu.dimension_semantics<parallel>, #tpu.dimension_semantics<arbitrary>], iteration_bounds = array<i64: 1, 1>, scalar_prefetch = 0 : i64, scratch_operands = 0 : i64, tpu.core_type = #tpu.core_type<tc>, window_params = [{transform_indices = @transform_0, window_bounds = array<i64: 8, 32>}, {pipeline_mode = #tpu.pipeline_mode<synchronous>, transform_indices = @transform_1, window_bounds = array<i64: 2, 32>}, {pipeline_mode = #tpu.pipeline_mode<synchronous>, transform_indices = @transform_2, window_bounds = array<i64: 2, 1>}, {transform_indices = @transform_3, window_bounds = array<i64: 2, 8>}]} {
    %c0_i32 = arith.constant 0 : i32
    %0 = arith.cmpi eq, %arg1, %c0_i32 : i32
    %1 = arith.extui %0 : i1 to i32
    %c0_i32_0 = arith.constant 0 : i32
    %2 = arith.cmpi ne, %1, %c0_i32_0 : i32
    scf.if %2 {
      %c0_8 = arith.constant 0 : index
      %c0_9 = arith.constant 0 : index
      %9 = vector.load %arg4[%c0_8, %c0_9] : memref<2x1xf32, #tpu.memory_space<vmem>>, vector<2x1xf32>
      %10 = vector.shape_cast %9 : vector<2x1xf32> to vector<2x1xf32>
      %11 = vector.broadcast %10 : vector<2x1xf32> to vector<2x8xf32>
      %c0_10 = arith.constant 0 : index
      %c0_11 = arith.constant 0 : index
      %12 = vector.load %arg5[%c0_10, %c0_11] : memref<2x8xf32, #tpu.memory_space<vmem>>, vector<2x8xf32>
      tpu.vector_store %arg5[%c0_10, %c0_11], %11 {strides = array<i32>} : memref<2x8xf32, #tpu.memory_space<vmem>>, vector<2x8xf32>,
    } else {
    }
    %c0 = arith.constant 0 : index
    %c0_1 = arith.constant 0 : index
    %3 = vector.load %arg2[%c0, %c0_1] : memref<8x32xf32, #tpu.memory_space<vmem>>, vector<8x32xf32>
    %c0_2 = arith.constant 0 : index
    %c0_3 = arith.constant 0 : index
    %4 = vector.load %arg5[%c0_2, %c0_3] : memref<2x8xf32, #tpu.memory_space<vmem>>, vector<2x8xf32>
    %c0_4 = arith.constant 0 : index
    %c0_5 = arith.constant 0 : index
    %5 = vector.load %arg3[%c0_4, %c0_5] : memref<2x32xf32, #tpu.memory_space<vmem>>, vector<2x32xf32>
    %cst = arith.constant dense<0.000000e+00> : vector<2x8xf32>
    %6 = tpu.matmul %5, %3, %cst {dimension_numbers = #tpu.dot_dimension_numbers<[1], [1], [0], [0], [0, 0, 1, 0], [], []>} : vector<2x32xf32>, vector<8x32xf32>, vector<2x8xf32> -> vector<2x8xf32>
    %7 = arith.addf %4, %6 : vector<2x8xf32>
    %c0_6 = arith.constant 0 : index
    %c0_7 = arith.constant 0 : index
    %8 = vector.load %arg5[%c0_6, %c0_7] : memref<2x8xf32, #tpu.memory_space<vmem>>, vector<2x8xf32>
    tpu.vector_store %arg5[%c0_6, %c0_7], %7 {strides = array<i32>} : memref<2x8xf32, #tpu.memory_space<vmem>>, vector<2x8xf32>,
    return
  }
  func.func @transform_0(%arg0: i32, %arg1: i32) -> (i32, i32) {
    %c0_i32 = arith.constant 0 : i32
    return %arg0, %arg1 : i32, i32
  }
  func.func @transform_1(%arg0: i32, %arg1: i32) -> (i32, i32) {
    %c0_i32 = arith.constant 0 : i32
    %c0_i32_0 = arith.constant 0 : i32
    return %c0_i32, %arg1 : i32, i32
  }
  func.func @transform_2(%arg0: i32, %arg1: i32) -> (i32, i32) {
    %c0_i32 = arith.constant 0 : i32
    %c0_i32_0 = arith.constant 0 : i32
    %c0_i32_1 = arith.constant 0 : i32
    return %c0_i32, %c0_i32_0 : i32, i32
  }
  func.func @transform_3(%arg0: i32, %arg1: i32) -> (i32, i32) {
    %c0_i32 = arith.constant 0 : i32
    %c0_i32_0 = arith.constant 0 : i32
    return %c0_i32, %arg0 : i32, i32
  }
}

module attributes {stable_mosaic.version = 11 : i64} {
  func.func @kernel(%arg0: i32, %arg1: i32, %arg2: memref<8x32xf32, #tpu.memory_space<vmem>>, %arg3: memref<2x32xf32, #tpu.memory_space<vmem>>, %arg4: memref<2x1xf32, #tpu.memory_space<vmem>>, %arg5: memref<2x8xf32, #tpu.memory_space<vmem>>) attributes {dimension_semantics = [#tpu.dimension_semantics<parallel>, #tpu.dimension_semantics<arbitrary>], iteration_bounds = array<i64: 1, 1>, scalar_prefetch = 0 : i64, scratch_operands = 0 : i64, tpu.core_type = #tpu.core_type<tc>, window_params = [{transform_indices = @transform_0, window_bounds = array<i64: 8, 32>}, {transform_indices = @transform_1, window_bounds = array<i64: 2, 32>}, {pipeline_mode = #tpu.pipeline_mode<synchronous>, transform_indices = @transform_2, window_bounds = array<i64: 2, 1>}, {transform_indices = @transform_3, window_bounds = array<i64: 2, 8>}]} {
    %c0_i32 = arith.constant 0 : i32
    %0 = arith.cmpi eq, %arg1, %c0_i32 : i32
    %1 = arith.extui %0 : i1 to i32
    %c0_i32_0 = arith.constant 0 : i32
    %2 = arith.cmpi ne, %1, %c0_i32_0 : i32
    scf.if %2 {
      %c0_8 = arith.constant 0 : index
      %c0_9 = arith.constant 0 : index
      %9 = vector.load %arg4[%c0_8, %c0_9] : memref<2x1xf32, #tpu.memory_space<vmem>>, vector<2x1xf32>
      %10 = vector.shape_cast %9 : vector<2x1xf32> to vector<2x1xf32>
      %11 = vector.broadcast %10 : vector<2x1xf32> to vector<2x8xf32>
      %c0_10 = arith.constant 0 : index
      %c0_11 = arith.constant 0 : index
      %12 = vector.load %arg5[%c0_10, %c0_11] : memref<2x8xf32, #tpu.memory_space<vmem>>, vector<2x8xf32>
      tpu.vector_store %arg5[%c0_10, %c0_11], %11 {strides = array<i32>} : memref<2x8xf32, #tpu.memory_space<vmem>>, vector<2x8xf32>,
    } else {
    }
    %c0 = arith.constant 0 : index
    %c0_1 = arith.constant 0 : index
    %3 = vector.load %arg2[%c0, %c0_1] : memref<8x32xf32, #tpu.memory_space<vmem>>, vector<8x32xf32>
    %c0_2 = arith.constant 0 : index
    %c0_3 = arith.constant 0 : index
    %4 = vector.load %arg5[%c0_2, %c0_3] : memref<2x8xf32, #tpu.memory_space<vmem>>, vector<2x8xf32>
    %c0_4 = arith.constant 0 : index
    %c0_5 = arith.constant 0 : index
    %5 = vector.load %arg3[%c0_4, %c0_5] : memref<2x32xf32, #tpu.memory_space<vmem>>, vector<2x32xf32>
    %cst = arith.constant dense<0.000000e+00> : vector<2x8xf32>
    %6 = tpu.matmul %5, %3, %cst {dimension_numbers = #tpu.dot_dimension_numbers<[1], [1], [0], [0], [0, 0, 1, 0], [], []>} : vector<2x32xf32>, vector<8x32xf32>, vector<2x8xf32> -> vector<2x8xf32>
    %7 = arith.addf %4, %6 : vector<2x8xf32>
    %c0_6 = arith.constant 0 : index
    %c0_7 = arith.constant 0 : index
    %8 = vector.load %arg5[%c0_6, %c0_7] : memref<2x8xf32, #tpu.memory_space<vmem>>, vector<2x8xf32>
    tpu.vector_store %arg5[%c0_6, %c0_7], %7 {strides = array<i32>} : memref<2x8xf32, #tpu.memory_space<vmem>>, vector<2x8xf32>,
    return
  }
  func.func @transform_0(%arg0: i32, %arg1: i32) -> (i32, i32) {
    %c0_i32 = arith.constant 0 : i32
    return %arg0, %arg1 : i32, i32
  }
  func.func @transform_1(%arg0: i32, %arg1: i32) -> (i32, i32) {
    %c0_i32 = arith.constant 0 : i32
    %c0_i32_0 = arith.constant 0 : i32
    return %c0_i32, %arg1 : i32, i32
  }
  func.func @transform_2(%arg0: i32, %arg1: i32) -> (i32, i32) {
    %c0_i32 = arith.constant 0 : i32
    %c0_i32_0 = arith.constant 0 : i32
    %c0_i32_1 = arith.constant 0 : i32
    return %c0_i32, %c0_i32_0 : i32, i32
  }
  func.func @transform_3(%arg0: i32, %arg1: i32) -> (i32, i32) {
    %c0_i32 = arith.constant 0 : i32
    %c0_i32_0 = arith.constant 0 : i32
    return %c0_i32, %arg0 : i32, i32
  }
}

</mosaic_0001>

<llo_original>
// kernel: tpu_custom_call.1
$region0: #{tpu_custom_call.1}
  #allocation0 [shape = 'u32[]', space=smem, size = 0x4, offset = 0x4, fixed_abs, tag = 'smem constant byte address 0x4 - core index']
  #allocation1 [shape = 'u32[144,128]{1,0:T(1,128)}', space=vmem, size = 0x12000, scoped, tag = 'internal scratch']
  %s0 = inlined_call_operand.hbm [shape: f32[8,32], index: 0, kind: input, shape index: {}]
  %s1 = inlined_call_operand.vmem [shape: f32[2,32], index: 1, kind: input, shape index: {}]
  %s2 = inlined_call_operand.vmem [shape: f32[2,1], index: 2, kind: input, shape index: {}]
  %s3 = inlined_call_operand.hbm [shape: f32[2,8], index: 3, kind: output, shape index: {}]
  %s4 = sld [smem:[#allocation0]]
  $region30: #{tpu_custom_call.1} parent=0
    _
  %s6 = ssub.s32 1, %s4
  %s7 = scalar_select 0, %s6, %s4
  $region1: #{tpu_custom_call.1} parent=0
    #allocation2 [shape = 'u8[4096]{0}', space=vmem, size = 0x1000, scoped, tag = 'input window, operand 0, single buffered']
    #allocation3 [shape = 's32[1]{0}', space=sflag, size = 0x4, scoped, tag = 'scoped memory for tpu_custom_call.1']
    #allocation4 [shape = 's32[1]{0}', space=sflag, size = 0x4, scoped, tag = 'scoped memory for tpu_custom_call.1']
    #allocation5 [shape = 'u8[1024]{0}', space=vmem, size = 0x400, scoped, tag = 'output window, operand 0, single buffered']
    %8 = vsyncpa [#allocation3], 0
    %9 = vsyncpa [#allocation4], 0
    // Predicated region
    $region2: #{tpu_custom_call.1} parent=1 // pred_check
      _
    $region3: #{tpu_custom_call.1} parent=1 // pred_check_branch
      %11 = sbr.rel (0) target = $region5
    $region4: #{tpu_custom_call.1} parent=1 // pred_region
      %s13 = ssub.s32 128, 128
      %14 = vsyncadd [#allocation3], %s13
      %s16 = sshll.u32 [#allocation2], 4
      %s17 = int_to_ptr.vmem [resolvable:$true] %s16
      %19 = dma.hbm_to_vmem [thread:$0]  %s0, 128, %s17, [#allocation3]
    $region5: #{tpu_custom_call.1} parent=1 // pred_fallthru
      _
    // Predicated region
    $region6: #{tpu_custom_call.1} parent=1 // pred_check
      _
    $region7: #{tpu_custom_call.1} parent=1 // pred_check_branch
      %21 = sbr.rel (0) target = $region9
    $region8: #{tpu_custom_call.1} parent=1 // pred_region
      _
    $region9: #{tpu_custom_call.1} parent=1 // pred_fallthru
      _
    // Predicated region
    $region10: #{tpu_custom_call.1} parent=1 // pred_check
      _
    $region11: #{tpu_custom_call.1} parent=1 // pred_check_branch
      %23 = sbr.rel (0) target = $region13
    $region12: #{tpu_custom_call.1} parent=1 // pred_region
      _
    $region13: #{tpu_custom_call.1} parent=1 // pred_fallthru
      _
    // Predicated region
    $region14: #{tpu_custom_call.1} parent=1 // pred_check
      _
    $region15: #{tpu_custom_call.1} parent=1 // pred_check_branch
      %25 = sbr.rel (0) target = $region17
    $region16: #{tpu_custom_call.1} parent=1 // pred_region
      %26 = dma.done [#allocation3], 128
    $region17: #{tpu_custom_call.1} parent=1 // pred_fallthru
      _
    %p27 = scmp.eq.s32.totalorder 0, 0
    // Predicated region
    $region18: #{tpu_custom_call.1} parent=1 // pred_check
      %p28 = pneg %p27
    $region19: #{tpu_custom_call.1} parent=1 // pred_check_branch
      %30 = sbr.rel (%p28) target = $region21
    $region20: #{tpu_custom_call.1} parent=1 // pred_region
      %v31 = vld [vmem:[%s2] sm:$0x3]
      %33 = vset.pattern.permute.xlu0 0
      %34 = vperm.xlu0 %33, %v31
      %v35 = vpop.permute.xlu0 %34
      %vm37 = vcmask 58368
      %38 = vst.msk [vmem:[#allocation5] sm:$0x3] %vm37, %v35
    $region21: #{tpu_custom_call.1} parent=1 // pred_fallthru
      _
    %v39 = vld [vmem:[#allocation2] sm:$0xff]
    %v40 = vld [vmem:[#allocation5] sm:$0x3]
    %v41 = vld [vmem:[%s1] sm:$0x3]
    %vm42 = vcmask 261120
    %v44 = vsel %vm42, %v41, 0
    %v47 = vsel %vm42, %v39, 0
    %49 = vmatprep.subr.mxu0 0.0
    %50 = vmatpush1.xpose.msra.mxu0 %v47
    %51 = vmatprep.subr.mxu0 0.0
    %52 = vmatpush1.xpose.msra.mxu0 0.0
    %53 = vmatprep.subr.mxu0 0.0
    %54 = vmatpush1.xpose.msra.mxu0 0.0
    %55 = vmatprep.subr.mxu0 0.0
    %56 = vmatpush1.xpose.msra.mxu0 0.0
    %57 = vmatprep.subr.mxu0 0.0
    %58 = vmatpush1.xpose.msra.mxu0 0.0
    %59 = vmatprep.subr.mxu0 0.0
    %60 = vmatpush1.xpose.msra.mxu0 0.0
    %61 = vmatprep.subr.mxu0 0.0
    %62 = vmatpush1.xpose.msra.mxu0 0.0
    %63 = vmatprep.subr.mxu0 0.0
    %64 = vmatpush1.xpose.msra.mxu0 0.0
    %65 = vmatprep.subr.mxu0 0.0
    %66 = vmatpush1.xpose.msra.mxu0 0.0
    %67 = vmatprep.subr.mxu0 0.0
    %68 = vmatpush1.xpose.msra.mxu0 0.0
    %69 = vmatprep.subr.mxu0 0.0
    %70 = vmatpush1.xpose.msra.mxu0 0.0
    %71 = vmatprep.subr.mxu0 0.0
    %72 = vmatpush1.xpose.msra.mxu0 0.0
    %73 = vmatprep.subr.mxu0 0.0
    %74 = vmatpush1.xpose.msra.mxu0 0.0
    %75 = vmatprep.subr.mxu0 0.0
    %76 = vmatpush1.xpose.msra.mxu0 0.0
    %77 = vmatprep.subr.mxu0 0.0
    %78 = vmatpush1.xpose.msra.mxu0 0.0
    %79 = vmatprep.subr.mxu0 0.0
    %80 = vmatpush1.xpose.msra.mxu0 0.0
    %81 = vmatprep.subr.mxu0 0.0
    %82 = vmatpush1.xpose.msra.mxu0 0.0
    %83 = vmatprep.subr.mxu0 0.0
    %84 = vmatpush1.xpose.msra.mxu0 0.0
    %85 = vmatprep.subr.mxu0 0.0
    %86 = vmatpush1.xpose.msra.mxu0 0.0
    %87 = vmatprep.subr.mxu0 0.0
    %88 = vmatpush1.xpose.msra.mxu0 0.0
    %89 = vmatprep.subr.mxu0 0.0
    %90 = vmatpush1.xpose.msra.mxu0 0.0
    %91 = vmatprep.subr.mxu0 0.0
    %92 = vmatpush1.xpose.msra.mxu0 0.0
    %93 = vmatprep.subr.mxu0 0.0
    %94 = vmatpush1.xpose.msra.mxu0 0.0
    %95 = vmatprep.subr.mxu0 0.0
    %96 = vmatpush1.xpose.msra.mxu0 0.0
    %97 = vmatprep.subr.mxu0 0.0
    %98 = vmatpush1.xpose.msra.mxu0 0.0
    %99 = vmatprep.subr.mxu0 0.0
    %100 = vmatpush1.xpose.msra.mxu0 0.0
    %101 = vmatprep.subr.mxu0 0.0
    %102 = vmatpush1.xpose.msra.mxu0 0.0
    %103 = vmatprep.subr.mxu0 0.0
    %104 = vmatpush1.xpose.msra.mxu0 0.0
    %105 = vmatprep.subr.mxu0 0.0
    %106 = vmatpush1.xpose.msra.mxu0 0.0
    %107 = vmatprep.subr.mxu0 0.0
    %108 = vmatpush1.xpose.msra.mxu0 0.0
    %109 = vmatprep.subr.mxu0 0.0
    %110 = vmatpush1.xpose.msra.mxu0 0.0
    %111 = vmatprep.subr.mxu0 0.0
    %112 = vmatpush1.xpose.msra.mxu0 0.0
    %113 = vmatprep.mubr.f32.mxu0 0.0
    %114 = vmatmul.mubr.f32.gmra.mrb[0].mxu0 %v44
    %v115 = vpop.f32.mrb[0].mxu0
    %v116 = vadd.f32 0.0, %v115
    %v117 = vpop.f32.mrb[0].mxu0
    %118 = vdwg.mxu0
    %v119 = vadd.f32 %v40, %v116
    %vm120 = vcmask 58368
    %121 = vst.msk [vmem:[#allocation5] sm:$0x3] %vm120, %v119
    // Predicated region
    $region22: #{tpu_custom_call.1} parent=1 // pred_check
      _
    $region23: #{tpu_custom_call.1} parent=1 // pred_check_branch
      %123 = sbr.rel (0) target = $region25
    $region24: #{tpu_custom_call.1} parent=1 // pred_region
      %s125 = ssub.s32 32, 32
      %126 = vsyncadd [#allocation4], %s125
      %s128 = sshll.u32 [#allocation5], 4
      %s129 = int_to_ptr.vmem [resolvable:$true] %s128
      %131 = dma.vmem_to_hbm [thread:$0]  %s129, 32, %s3, [#allocation4]
    $region25: #{tpu_custom_call.1} parent=1 // pred_fallthru
      _
    // Predicated region
    $region26: #{tpu_custom_call.1} parent=1 // pred_check
      _
    $region27: #{tpu_custom_call.1} parent=1 // pred_check_branch
      %133 = sbr.rel (0) target = $region29
    $region28: #{tpu_custom_call.1} parent=1 // pred_region
      %134 = dma.done [#allocation4], 32
    $region29: #{tpu_custom_call.1} parent=1 // pred_fallthru
      _
    %135 = vsyncpa [#allocation3], 1
    %136 = vsyncpa [#allocation4], 1

// kernel: tpu_custom_call.1
$region0: #{tpu_custom_call.1}
  #allocation0 [shape = 'u32[]', space=smem, size = 0x4, offset = 0x4, fixed_abs, tag = 'smem constant byte address 0x4 - core index']
  #allocation1 [shape = 'u32[144,128]{1,0:T(1,128)}', space=vmem, size = 0x12000, scoped, tag = 'internal scratch']
  %s0 = inlined_call_operand.hbm [shape: f32[8,32], index: 0, kind: input, shape index: {}]
  %s1 = inlined_call_operand.vmem [shape: f32[2,32], index: 1, kind: input, shape index: {}]
  %s2 = inlined_call_operand.vmem [shape: f32[2,1], index: 2, kind: input, shape index: {}]
  %s3 = inlined_call_operand.hbm [shape: f32[2,8], index: 3, kind: output, shape index: {}]
  %s4 = sld [smem:[#allocation0]]
  $region30: #{tpu_custom_call.1} parent=0
    _
  %s6 = ssub.s32 1, %s4
  %s7 = scalar_select 0, %s6, %s4
  $region1: #{tpu_custom_call.1} parent=0
    #allocation2 [shape = 'u8[4096]{0}', space=vmem, size = 0x1000, scoped, tag = 'input window, operand 0, single buffered']
    #allocation3 [shape = 's32[1]{0}', space=sflag, size = 0x4, scoped, tag = 'scoped memory for tpu_custom_call.1']
    #allocation4 [shape = 's32[1]{0}', space=sflag, size = 0x4, scoped, tag = 'scoped memory for tpu_custom_call.1']
    #allocation5 [shape = 'u8[1024]{0}', space=vmem, size = 0x400, scoped, tag = 'output window, operand 0, single buffered']
    %8 = vsyncpa [#allocation3], 0
    %9 = vsyncpa [#allocation4], 0
    // Predicated region
    $region2: #{tpu_custom_call.1} parent=1 // pred_check
      _
    $region3: #{tpu_custom_call.1} parent=1 // pred_check_branch
      %11 = sbr.rel (0) target = $region5
    $region4: #{tpu_custom_call.1} parent=1 // pred_region
      %s13 = ssub.s32 128, 128
      %14 = vsyncadd [#allocation3], %s13
      %s16 = sshll.u32 [#allocation2], 4
      %s17 = int_to_ptr.vmem [resolvable:$true] %s16
      %19 = dma.hbm_to_vmem [thread:$0]  %s0, 128, %s17, [#allocation3]
    $region5: #{tpu_custom_call.1} parent=1 // pred_fallthru
      _
    // Predicated region
    $region6: #{tpu_custom_call.1} parent=1 // pred_check
      _
    $region7: #{tpu_custom_call.1} parent=1 // pred_check_branch
      %21 = sbr.rel (0) target = $region9
    $region8: #{tpu_custom_call.1} parent=1 // pred_region
      _
    $region9: #{tpu_custom_call.1} parent=1 // pred_fallthru
      _
    // Predicated region
    $region10: #{tpu_custom_call.1} parent=1 // pred_check
      _
    $region11: #{tpu_custom_call.1} parent=1 // pred_check_branch
      %23 = sbr.rel (0) target = $region13
    $region12: #{tpu_custom_call.1} parent=1 // pred_region
      _
    $region13: #{tpu_custom_call.1} parent=1 // pred_fallthru
      _
    // Predicated region
    $region14: #{tpu_custom_call.1} parent=1 // pred_check
      _
    $region15: #{tpu_custom_call.1} parent=1 // pred_check_branch
      %25 = sbr.rel (0) target = $region17
    $region16: #{tpu_custom_call.1} parent=1 // pred_region
      %26 = dma.done [#allocation3], 128
    $region17: #{tpu_custom_call.1} parent=1 // pred_fallthru
      _
    %p27 = scmp.eq.s32.totalorder 0, 0
    // Predicated region
    $region18: #{tpu_custom_call.1} parent=1 // pred_check
      %p28 = pneg %p27
    $region19: #{tpu_custom_call.1} parent=1 // pred_check_branch
      %30 = sbr.rel (%p28) target = $region21
    $region20: #{tpu_custom_call.1} parent=1 // pred_region
      %v31 = vld [vmem:[%s2] sm:$0x3]
      %33 = vset.pattern.permute.xlu0 0
      %34 = vperm.xlu0 %33, %v31
      %v35 = vpop.permute.xlu0 %34
      %vm37 = vcmask 58368
      %38 = vst.msk [vmem:[#allocation5] sm:$0x3] %vm37, %v35
    $region21: #{tpu_custom_call.1} parent=1 // pred_fallthru
      _
    %v39 = vld [vmem:[#allocation2] sm:$0xff]
    %v40 = vld [vmem:[#allocation5] sm:$0x3]
    %v41 = vld [vmem:[%s1] sm:$0x3]
    %vm42 = vcmask 261120
    %v44 = vsel %vm42, %v41, 0
    %v47 = vsel %vm42, %v39, 0
    %49 = vmatprep.subr.mxu0 0.0
    %50 = vmatpush1.xpose.msra.mxu0 %v47
    %51 = vmatprep.subr.mxu0 0.0
    %52 = vmatpush1.xpose.msra.mxu0 0.0
    %53 = vmatprep.subr.mxu0 0.0
    %54 = vmatpush1.xpose.msra.mxu0 0.0
    %55 = vmatprep.subr.mxu0 0.0
    %56 = vmatpush1.xpose.msra.mxu0 0.0
    %57 = vmatprep.subr.mxu0 0.0
    %58 = vmatpush1.xpose.msra.mxu0 0.0
    %59 = vmatprep.subr.mxu0 0.0
    %60 = vmatpush1.xpose.msra.mxu0 0.0
    %61 = vmatprep.subr.mxu0 0.0
    %62 = vmatpush1.xpose.msra.mxu0 0.0
    %63 = vmatprep.subr.mxu0 0.0
    %64 = vmatpush1.xpose.msra.mxu0 0.0
    %65 = vmatprep.subr.mxu0 0.0
    %66 = vmatpush1.xpose.msra.mxu0 0.0
    %67 = vmatprep.subr.mxu0 0.0
    %68 = vmatpush1.xpose.msra.mxu0 0.0
    %69 = vmatprep.subr.mxu0 0.0
    %70 = vmatpush1.xpose.msra.mxu0 0.0
    %71 = vmatprep.subr.mxu0 0.0
    %72 = vmatpush1.xpose.msra.mxu0 0.0
    %73 = vmatprep.subr.mxu0 0.0
    %74 = vmatpush1.xpose.msra.mxu0 0.0
    %75 = vmatprep.subr.mxu0 0.0
    %76 = vmatpush1.xpose.msra.mxu0 0.0
    %77 = vmatprep.subr.mxu0 0.0
    %78 = vmatpush1.xpose.msra.mxu0 0.0
    %79 = vmatprep.subr.mxu0 0.0
    %80 = vmatpush1.xpose.msra.mxu0 0.0
    %81 = vmatprep.subr.mxu0 0.0
    %82 = vmatpush1.xpose.msra.mxu0 0.0
    %83 = vmatprep.subr.mxu0 0.0
    %84 = vmatpush1.xpose.msra.mxu0 0.0
    %85 = vmatprep.subr.mxu0 0.0
    %86 = vmatpush1.xpose.msra.mxu0 0.0
    %87 = vmatprep.subr.mxu0 0.0
    %88 = vmatpush1.xpose.msra.mxu0 0.0
    %89 = vmatprep.subr.mxu0 0.0
    %90 = vmatpush1.xpose.msra.mxu0 0.0
    %91 = vmatprep.subr.mxu0 0.0
    %92 = vmatpush1.xpose.msra.mxu0 0.0
    %93 = vmatprep.subr.mxu0 0.0
    %94 = vmatpush1.xpose.msra.mxu0 0.0
    %95 = vmatprep.subr.mxu0 0.0
    %96 = vmatpush1.xpose.msra.mxu0 0.0
    %97 = vmatprep.subr.mxu0 0.0
    %98 = vmatpush1.xpose.msra.mxu0 0.0
    %99 = vmatprep.subr.mxu0 0.0
    %100 = vmatpush1.xpose.msra.mxu0 0.0
    %101 = vmatprep.subr.mxu0 0.0
    %102 = vmatpush1.xpose.msra.mxu0 0.0
    %103 = vmatprep.subr.mxu0 0.0
    %104 = vmatpush1.xpose.msra.mxu0 0.0
    %105 = vmatprep.subr.mxu0 0.0
    %106 = vmatpush1.xpose.msra.mxu0 0.0
    %107 = vmatprep.subr.mxu0 0.0
    %108 = vmatpush1.xpose.msra.mxu0 0.0
    %109 = vmatprep.subr.mxu0 0.0
    %110 = vmatpush1.xpose.msra.mxu0 0.0
    %111 = vmatprep.subr.mxu0 0.0
    %112 = vmatpush1.xpose.msra.mxu0 0.0
    %113 = vmatprep.mubr.f32.mxu0 0.0
    %114 = vmatmul.mubr.f32.gmra.mrb[0].mxu0 %v44
    %v115 = vpop.f32.mrb[0].mxu0
    %v116 = vadd.f32 0.0, %v115
    %v117 = vpop.f32.mrb[0].mxu0
    %118 = vdwg.mxu0
    %v119 = vadd.f32 %v40, %v116
    %vm120 = vcmask 58368
    %121 = vst.msk [vmem:[#allocation5] sm:$0x3] %vm120, %v119
    // Predicated region
    $region22: #{tpu_custom_call.1} parent=1 // pred_check
      _
    $region23: #{tpu_custom_call.1} parent=1 // pred_check_branch
      %123 = sbr.rel (0) target = $region25
    $region24: #{tpu_custom_call.1} parent=1 // pred_region
      %s125 = ssub.s32 32, 32
      %126 = vsyncadd [#allocation4], %s125
      %s128 = sshll.u32 [#allocation5], 4
      %s129 = int_to_ptr.vmem [resolvable:$true] %s128
      %131 = dma.vmem_to_hbm [thread:$0]  %s129, 32, %s3, [#allocation4]
    $region25: #{tpu_custom_call.1} parent=1 // pred_fallthru
      _
    // Predicated region
    $region26: #{tpu_custom_call.1} parent=1 // pred_check
      _
    $region27: #{tpu_custom_call.1} parent=1 // pred_check_branch
      %133 = sbr.rel (0) target = $region29
    $region28: #{tpu_custom_call.1} parent=1 // pred_region
      %134 = dma.done [#allocation4], 32
    $region29: #{tpu_custom_call.1} parent=1 // pred_fallthru
      _
    %135 = vsyncpa [#allocation3], 1
    %136 = vsyncpa [#allocation4], 1

</llo_original>
